<compile_context>
chip_gen: v6e
topology: v6e:2x2x1
jax: 0.10.0
libtpu: 0.0.40
codegen_flags: <defaults>
</compile_context>

<pallas_src>
import math

import jax
import jax.numpy as jnp
from jax.experimental import pallas as pl
from jax.experimental.pallas import tpu as pltpu

# ------------------------- config (small, consistent with module) -------------------------
HIDDEN_SIZE = 32
MULTI_HEAD = 4                      # != 8 -> local_init() path is reproduced
HIDDEN_SIZE_HEAD = HIDDEN_SIZE // MULTI_HEAD
DROPOUT_R = 0.1                     # eval mode -> dropout is identity
B = 2
N = 16                              # num patches (perfect square: img_size = 4)


# ------------------------------------ fused Pallas kernel ------------------------------------
def ga_mhatt_kernel(x_ref, bias_ref, wqkv_ref, bqkv_ref, hmask_ref, posg_ref,
                    sum1h_ref, spreadg_ref, wm_ref, bm_ref, o_ref):
    # Per grid step = one batch element.
    # x_ref:      (N, 3D)    concatenated [v | k | q] token features for this batch
    # bias_ref:   (1, H*N)   additive mask bias, tiled per head (-1e9 on masked keys)
    # wqkv_ref:   (3D, 3D)   block-diag(Wv^T, Wk^T, Wq^T/sqrt(Dh))
    # bqkv_ref:   (1, 3D)    [b_v | b_k | b_q/sqrt(Dh)]
    # hmask_ref:  (H*N, D)   head mask: row h*N+j keeps only feature columns of head h
    # posg_ref:   (N, H*N)   head-stacked sigmoid(g_h)*softmax(pos_logits_h)
    # sum1h_ref:  (H*N, H)   one-hot segment-sum matrix (per-head softmax denominator)
    # spreadg_ref:(H, H*N)   per-head broadcast matrix pre-scaled by (1 - sigmoid(g_h))
    # wm_ref:     (D, D)     W_merge^T
    # bm_ref:     (1, D)     b_merge
    # o_ref:      (N, D)     output for this batch
    Nn = x_ref.shape[0]
    D = wm_ref.shape[0]
    HN = posg_ref.shape[1]
    H = HN // Nn

    # Fused QKV projection: one (N, 3D) @ (3D, 3D) MXU pass (scale already folded in).
    xp = jnp.dot(x_ref[...], wqkv_ref[...],
                 preferred_element_type=jnp.float32) + bqkv_ref[...]      # (N, 3D)
    vp = xp[:, 0:D]               # (N, D)
    kp = xp[:, D:2 * D]           # (N, D)
    qp = xp[:, 2 * D:3 * D]       # (N, D), already scaled by 1/sqrt(Dh)

    # Head-stacked k / v: sublane-tile H times, zero out other heads' feature columns.
    hm = hmask_ref[...]                                                   # (H*N, D)
    kstack = jnp.concatenate([kp] * H, axis=0) * hm                       # (H*N, D)
    vstack = jnp.concatenate([vp] * H, axis=0) * hm                       # (H*N, D)

    # All-head scores in ONE matmul (contract feature axes, no explicit transpose).
    s = jax.lax.dot_general(qp, kstack, (((1,), (1,)), ((), ())),
                            preferred_element_type=jnp.float32)           # (N, H*N)
    s = s + bias_ref[...]                                                 # additive mask

    # Per-head (16-lane segment) softmax on a lane-dense tile, stabilized by the
    # global row max (valid: softmax is shift-invariant within each segment).
    m = jnp.max(s, axis=-1, keepdims=True)                                # (N, 1)
    p = jnp.exp(s - m)                                                    # (N, H*N)
    ssum = jnp.dot(p, sum1h_ref[...],
                   preferred_element_type=jnp.float32)                    # (N, H)
    scale = jnp.dot(pl.reciprocal(ssum, approx=True), spreadg_ref[...],
                    preferred_element_type=jnp.float32)                   # (N, H*N) = (1-g_h)/sum_h

    # Gated attention: (1-g)*softmax(scores) + g*softmax(pos); sums to 1 -> no renorm needed.
    # TODO(synk): dropout on att_map / pos_map / attn is identity (eval mode).
    attn = p * scale + posg_ref[...]                                      # (N, H*N)

    # Context for all heads in ONE matmul; result is already head-major (N, D) "atted".
    ctx = jnp.dot(attn, vstack, preferred_element_type=jnp.float32)       # (N, D)

    # Merge: single (N, D) @ (D, D) matmul.
    o_ref[...] = jnp.dot(ctx, wm_ref[...],
                         preferred_element_type=jnp.float32) + bm_ref[...]


# --------------------------------------- glue / setup ---------------------------------------
def get_rel_indices(num_patches):
    img = int(num_patches ** 0.5)
    ar = jnp.arange(img)
    ind = ar[None, :] - ar[:, None]                        # (img, img)
    indx = jnp.tile(ind, (img, img))                       # torch .repeat(img, img)
    indy = jnp.repeat(jnp.repeat(ind, img, axis=0), img, axis=1)
    indd = indx ** 2 + indy ** 2
    rel = jnp.stack([indx, indy, indd], axis=-1).astype(jnp.float32)  # (N, N, 3)
    return rel


def init_params(key):
    def linear_init(k, fan_out, fan_in):
        kw, kb = jax.random.split(k)
        bound = 1.0 / math.sqrt(fan_in)
        w = jax.random.uniform(kw, (fan_out, fan_in), jnp.float32, -bound, bound)
        b = jax.random.uniform(kb, (fan_out,), jnp.float32, -bound, bound)
        return w, b

    keys = jax.random.split(key, 6)
    w_v, b_v = linear_init(keys[0], HIDDEN_SIZE, HIDDEN_SIZE)
    w_k, b_k = linear_init(keys[1], HIDDEN_SIZE, HIDDEN_SIZE)
    w_q, b_q = linear_init(keys[2], HIDDEN_SIZE, HIDDEN_SIZE)
    w_m, b_m = linear_init(keys[3], HIDDEN_SIZE, HIDDEN_SIZE)
    w_pos, b_pos = linear_init(keys[4], MULTI_HEAD, 3)
    gating = jnp.ones((MULTI_HEAD,), jnp.float32)

    # local_init() since MULTI_HEAD != 8 (deterministic):
    w_v = jnp.eye(HIDDEN_SIZE, dtype=jnp.float32)
    locality_strength = 1.0
    locality_distance = 1
    kernel_size = int(MULTI_HEAD ** 0.5)
    center = (kernel_size - 1) / 2 if kernel_size % 2 == 0 else kernel_size // 2
    wp = w_pos
    for h1 in range(kernel_size):
        for h2 in range(kernel_size):
            position = h1 + kernel_size * h2
            wp = wp.at[position, 2].set(-1.0)
            wp = wp.at[position, 1].set(2.0 * (h1 - center) * locality_distance)
            wp = wp.at[position, 0].set(2.0 * (h2 - center) * locality_distance)
    w_pos = wp * locality_strength
    # NOTE: self.qk Linear is unused in forward(); omitted.

    return dict(w_v=w_v, b_v=b_v, w_k=w_k, b_k=b_k, w_q=w_q, b_q=b_q,
                w_merge=w_m, b_merge=b_m, w_pos=w_pos, b_pos=b_pos, gating=gating)


def prepare_constants(params, num_patches):
    """Parameter-only preprocessing, done ONCE (hoisted out of the per-call forward)."""
    D, H, Dh = HIDDEN_SIZE, MULTI_HEAD, HIDDEN_SIZE_HEAD
    Nn = num_patches
    scale = 1.0 / math.sqrt(Dh)

    # Block-diagonal fused QKV weight; 1/sqrt(Dh) folded into the q block (weight + bias).
    w_blk = jnp.zeros((3 * D, 3 * D), jnp.float32)
    w_blk = w_blk.at[0:D, 0:D].set(params["w_v"].T)
    w_blk = w_blk.at[D:2 * D, D:2 * D].set(params["w_k"].T)
    w_blk = w_blk.at[2 * D:3 * D, 2 * D:3 * D].set(params["w_q"].T * scale)
    b_cat = jnp.concatenate(
        [params["b_v"], params["b_k"], params["b_q"] * scale]).reshape(1, 3 * D)

    # Batch-invariant gated positional attention, head-stacked along lanes.
    rel = get_rel_indices(Nn)                                              # (N, N, 3)
    pos_logits = jnp.transpose(rel @ params["w_pos"].T + params["b_pos"],
                               (2, 0, 1))                                  # (H, N, N)
    pos_map = jax.nn.softmax(pos_logits, axis=-1)
    g = jax.nn.sigmoid(params["gating"]).astype(jnp.float32)               # (H,)
    pos_gated = g[:, None, None] * pos_map                                 # (H, N, N)
    posg_stack = jnp.transpose(pos_gated, (1, 0, 2)).reshape(Nn, H * Nn)   # (N, H*N)

    head_of_row = jnp.repeat(jnp.arange(H), Nn)                            # (H*N,) = row // N
    head_of_col = jnp.repeat(jnp.arange(H), Dh)                            # (D,)   = col // Dh
    headmask = (head_of_row[:, None] == head_of_col[None, :]).astype(jnp.float32)   # (H*N, D)
    sum_onehot = (head_of_row[:, None] == jnp.arange(H)[None, :]).astype(jnp.float32)  # (H*N, H)
    spread_g = ((jnp.arange(H)[:, None] == head_of_row[None, :]).astype(jnp.float32)
                * (1.0 - g)[:, None])                                      # (H, H*N)

    return dict(w_blk=w_blk, b_cat=b_cat, headmask=headmask, posg_stack=posg_stack,
                sum_onehot=sum_onehot, spread_g=spread_g,
                wm_t=params["w_merge"].T, bm=params["b_merge"].reshape(1, D))


def ga_mhatt_forward(consts, v_in, k_in, q_in, mask):
    Bn, Nn, D = q_in.shape
    H = MULTI_HEAD

    # Runtime-only prep: token concat and additive mask bias (tiled per head).
    x_cat = jnp.concatenate([v_in, k_in, q_in], axis=-1)                   # (B, N, 3D)
    mask_b = mask.reshape(Bn, 1, Nn).astype(jnp.float32)
    bias = jnp.tile(mask_b * (-1e9), (1, 1, H))                            # (B, 1, H*N)

    def bmap(b):
        return (b, 0, 0)

    def cmap(b):
        return (0, 0)

    out = pl.pallas_call(
        ga_mhatt_kernel,
        out_shape=jax.ShapeDtypeStruct((Bn, Nn, D), jnp.float32),
        grid=(Bn,),
        in_specs=[
            pl.BlockSpec((None, Nn, 3 * D), bmap),        # x_cat
            pl.BlockSpec((None, 1, H * Nn), bmap),        # mask bias
            pl.BlockSpec((3 * D, 3 * D), cmap),           # w_blk
            pl.BlockSpec((1, 3 * D), cmap),               # b_cat
            pl.BlockSpec((H * Nn, D), cmap),              # headmask
            pl.BlockSpec((Nn, H * Nn), cmap),             # posg_stack
            pl.BlockSpec((H * Nn, H), cmap),              # sum_onehot
            pl.BlockSpec((H, H * Nn), cmap),              # spread_g
            pl.BlockSpec((D, D), cmap),                   # wm_t
            pl.BlockSpec((1, D), cmap),                   # bm
        ],
        out_specs=pl.BlockSpec((None, Nn, D), bmap),
        compiler_params=pltpu.CompilerParams(dimension_semantics=("parallel",)),
    )(x_cat, bias, consts["w_blk"], consts["b_cat"], consts["headmask"],
      consts["posg_stack"], consts["sum_onehot"], consts["spread_g"],
      consts["wm_t"], consts["bm"])
    return out


# ------------------------------ pure-JAX reference (for check) ------------------------------
def ga_mhatt_reference(params, v_in, k_in, q_in, mask):
    Bn, Nn, D = q_in.shape
    H, Dh = MULTI_HEAD, HIDDEN_SIZE_HEAD

    def lin(x, w, b):
        return x @ w.T + b

    def split_heads(x):
        return x.reshape(Bn, Nn, H, Dh).transpose(0, 2, 1, 3)

    vh = split_heads(lin(v_in, params["w_v"], params["b_v"]))
    kh = split_heads(lin(k_in, params["w_k"], params["b_k"]))
    qh = split_heads(lin(q_in, params["w_q"], params["b_q"]))

    rel = get_rel_indices(Nn)
    pos = jnp.transpose(rel @ params["w_pos"].T + params["b_pos"], (2, 0, 1))[None]  # (1,H,N,N)

    scores = jnp.einsum("bhqd,bhkd->bhqk", qh, kh) / math.sqrt(Dh)
    scores = jnp.where(mask > 0.5, -1e9, scores)
    att_map = jax.nn.softmax(scores, axis=-1)
    pos_map = jax.nn.softmax(pos, axis=-1)
    g = jax.nn.sigmoid(params["gating"]).reshape(1, H, 1, 1)
    attn = (1.0 - g) * att_map + g * pos_map
    attn = attn / jnp.sum(attn, axis=-1, keepdims=True)
    out = jnp.einsum("bhqk,bhkd->bhqd", attn, vh)
    out = out.transpose(0, 2, 1, 3).reshape(Bn, Nn, D)
    return lin(out, params["w_merge"], params["b_merge"])


# --------------------------------------------- main ---------------------------------------------
if __name__ == "__main__":
    key = jax.random.PRNGKey(0)
    kp, kv, kk, kq = jax.random.split(key, 4)

    params = init_params(kp)
    consts = prepare_constants(params, N)     # param-only prep, computed once

    v = jax.random.normal(kv, (B, N, HIDDEN_SIZE), jnp.float32)
    k = jax.random.normal(kk, (B, N, HIDDEN_SIZE), jnp.float32)
    q = jax.random.normal(kq, (B, N, HIDDEN_SIZE), jnp.float32)

    # padding mask: batch 0 full length, batch 1 last 4 tokens masked
    lengths = jnp.array([N, N - 4])
    mask = (jnp.arange(N)[None, :] >= lengths[:, None]).astype(jnp.float32)  # (B, N)
    mask = mask.reshape(B, 1, 1, N)

    fwd = jax.jit(ga_mhatt_forward)
    out = fwd(consts, v, k, q, mask)
    out = jax.block_until_ready(out)

    ref = ga_mhatt_reference(params, v, k, q, mask)
    assert out.shape == (B, N, HIDDEN_SIZE)
    assert jnp.allclose(out, ref, atol=1e-3, rtol=1e-3), \
        f"mismatch: max abs diff {jnp.max(jnp.abs(out - ref))}"

    print("KERNEL_OK")
</pallas_src>

<mosaic_0001>
module attributes {stable_mosaic.version = 11 : i64} {
  func.func @ga_mhatt_kernel(%arg0: i32, %arg1: memref<1x16x96xf32, #tpu.memory_space<vmem>>, %arg2: memref<1x1x64xf32, #tpu.memory_space<vmem>>, %arg3: memref<96x96xf32, #tpu.memory_space<vmem>>, %arg4: memref<1x96xf32, #tpu.memory_space<vmem>>, %arg5: memref<64x32xf32, #tpu.memory_space<vmem>>, %arg6: memref<16x64xf32, #tpu.memory_space<vmem>>, %arg7: memref<64x4xf32, #tpu.memory_space<vmem>>, %arg8: memref<4x64xf32, #tpu.memory_space<vmem>>, %arg9: memref<32x32xf32, #tpu.memory_space<vmem>>, %arg10: memref<1x32xf32, #tpu.memory_space<vmem>>, %arg11: memref<1x16x32xf32, #tpu.memory_space<vmem>>) attributes {dimension_semantics = [#tpu.dimension_semantics<parallel>], iteration_bounds = array<i64: 2>, scalar_prefetch = 0 : i64, scratch_operands = 0 : i64, tpu.core_type = #tpu.core_type<tc>, window_params = [{transform_indices = @transform_0, window_bounds = array<i64: 1, 16, 96>}, {transform_indices = @transform_1, window_bounds = array<i64: 1, 1, 64>}, {pipeline_mode = #tpu.pipeline_mode<synchronous>, transform_indices = @transform_2, window_bounds = array<i64: 96, 96>}, {pipeline_mode = #tpu.pipeline_mode<synchronous>, transform_indices = @transform_3, window_bounds = array<i64: 1, 96>}, {pipeline_mode = #tpu.pipeline_mode<synchronous>, transform_indices = @transform_4, window_bounds = array<i64: 64, 32>}, {pipeline_mode = #tpu.pipeline_mode<synchronous>, transform_indices = @transform_5, window_bounds = array<i64: 16, 64>}, {pipeline_mode = #tpu.pipeline_mode<synchronous>, transform_indices = @transform_6, window_bounds = array<i64: 64, 4>}, {pipeline_mode = #tpu.pipeline_mode<synchronous>, transform_indices = @transform_7, window_bounds = array<i64: 4, 64>}, {pipeline_mode = #tpu.pipeline_mode<synchronous>, transform_indices = @transform_8, window_bounds = array<i64: 32, 32>}, {pipeline_mode = #tpu.pipeline_mode<synchronous>, transform_indices = @transform_9, window_bounds = array<i64: 1, 32>}, {transform_indices = @transform_10, window_bounds = array<i64: 1, 16, 32>}]} {
    %c0 = arith.constant 0 : index
    %c0_0 = arith.constant 0 : index
    %c0_1 = arith.constant 0 : index
    %0 = vector.load %arg1[%c0, %c0_0, %c0_1] : memref<1x16x96xf32, #tpu.memory_space<vmem>>, vector<1x16x96xf32>
    %1 = vector.shape_cast %0 : vector<1x16x96xf32> to vector<16x96xf32>
    %c0_2 = arith.constant 0 : index
    %c0_3 = arith.constant 0 : index
    %2 = vector.load %arg3[%c0_2, %c0_3] : memref<96x96xf32, #tpu.memory_space<vmem>>, vector<96x96xf32>
    %cst = arith.constant dense<0.000000e+00> : vector<16x96xf32>
    %3 = tpu.matmul %1, %2, %cst {dimension_numbers = #tpu.dot_dimension_numbers<[1], [0], [0], [1], [0, 0, 1, 1], [], []>} : vector<16x96xf32>, vector<96x96xf32>, vector<16x96xf32> -> vector<16x96xf32>
    %c0_4 = arith.constant 0 : index
    %c0_5 = arith.constant 0 : index
    %4 = vector.load %arg4[%c0_4, %c0_5] : memref<1x96xf32, #tpu.memory_space<vmem>>, vector<1x96xf32>
    %5 = vector.broadcast %4 : vector<1x96xf32> to vector<16x96xf32>
    %6 = arith.addf %3, %5 : vector<16x96xf32>
    %7 = vector.extract_strided_slice %6 {offsets = [0, 0], sizes = [16, 32], strides = [1, 1]} : vector<16x96xf32> to vector<16x32xf32>
    %8 = vector.extract_strided_slice %6 {offsets = [0, 32], sizes = [16, 32], strides = [1, 1]} : vector<16x96xf32> to vector<16x32xf32>
    %9 = vector.extract_strided_slice %6 {offsets = [0, 64], sizes = [16, 32], strides = [1, 1]} : vector<16x96xf32> to vector<16x32xf32>
    %c0_6 = arith.constant 0 : index
    %c0_7 = arith.constant 0 : index
    %10 = vector.load %arg5[%c0_6, %c0_7] : memref<64x32xf32, #tpu.memory_space<vmem>>, vector<64x32xf32>
    %11 = tpu.concatenate %8, %8, %8, %8 in 0 : vector<16x32xf32>, vector<16x32xf32>, vector<16x32xf32>, vector<16x32xf32> -> vector<64x32xf32>
    %12 = arith.mulf %11, %10 : vector<64x32xf32>
    %13 = tpu.concatenate %7, %7, %7, %7 in 0 : vector<16x32xf32>, vector<16x32xf32>, vector<16x32xf32>, vector<16x32xf32> -> vector<64x32xf32>
    %14 = arith.mulf %13, %10 : vector<64x32xf32>
    %cst_8 = arith.constant dense<0.000000e+00> : vector<16x64xf32>
    %15 = tpu.matmul %9, %12, %cst_8 {dimension_numbers = #tpu.dot_dimension_numbers<[1], [1], [0], [0], [0, 0, 1, 0], [], []>} : vector<16x32xf32>, vector<64x32xf32>, vector<16x64xf32> -> vector<16x64xf32>
    %c0_9 = arith.constant 0 : index
    %c0_10 = arith.constant 0 : index
    %c0_11 = arith.constant 0 : index
    %16 = vector.load %arg2[%c0_9, %c0_10, %c0_11] : memref<1x1x64xf32, #tpu.memory_space<vmem>>, vector<1x1x64xf32>
    %17 = vector.shape_cast %16 : vector<1x1x64xf32> to vector<1x64xf32>
    %18 = vector.broadcast %17 : vector<1x64xf32> to vector<16x64xf32>
    %19 = arith.addf %15, %18 : vector<16x64xf32>
    %cst_12 = arith.constant dense<0xFF800000> : vector<16xf32>
    %20 = vector.multi_reduction <maximumf>, %19, %cst_12 [1] : vector<16x64xf32> to vector<16xf32>
    %21 = vector.shape_cast %20 : vector<16xf32> to vector<16x1xf32>
    %22 = vector.broadcast %21 : vector<16x1xf32> to vector<16x64xf32>
    %23 = arith.subf %19, %22 : vector<16x64xf32>
    %24 = math.exp %23 : vector<16x64xf32>
    %c0_13 = arith.constant 0 : index
    %c0_14 = arith.constant 0 : index
    %25 = vector.load %arg7[%c0_13, %c0_14] : memref<64x4xf32, #tpu.memory_space<vmem>>, vector<64x4xf32>
    %cst_15 = arith.constant dense<0.000000e+00> : vector<16x4xf32>
    %26 = tpu.matmul %24, %25, %cst_15 {dimension_numbers = #tpu.dot_dimension_numbers<[1], [0], [0], [1], [0, 0, 1, 1], [], []>} : vector<16x64xf32>, vector<64x4xf32>, vector<16x4xf32> -> vector<16x4xf32>
    %27 = tpu.reciprocal %26 {approx = true} : vector<16x4xf32> -> vector<16x4xf32>
    %c0_16 = arith.constant 0 : index
    %c0_17 = arith.constant 0 : index
    %28 = vector.load %arg8[%c0_16, %c0_17] : memref<4x64xf32, #tpu.memory_space<vmem>>, vector<4x64xf32>
    %cst_18 = arith.constant dense<0.000000e+00> : vector<16x64xf32>
    %29 = tpu.matmul %27, %28, %cst_18 {dimension_numbers = #tpu.dot_dimension_numbers<[1], [0], [0], [1], [0, 0, 1, 1], [], []>} : vector<16x4xf32>, vector<4x64xf32>, vector<16x64xf32> -> vector<16x64xf32>
    %30 = arith.mulf %24, %29 : vector<16x64xf32>
    %c0_19 = arith.constant 0 : index
    %c0_20 = arith.constant 0 : index
    %31 = vector.load %arg6[%c0_19, %c0_20] : memref<16x64xf32, #tpu.memory_space<vmem>>, vector<16x64xf32>
    %32 = arith.addf %30, %31 : vector<16x64xf32>
    %cst_21 = arith.constant dense<0.000000e+00> : vector<16x32xf32>
    %33 = tpu.matmul %32, %14, %cst_21 {dimension_numbers = #tpu.dot_dimension_numbers<[1], [0], [0], [1], [0, 0, 1, 1], [], []>} : vector<16x64xf32>, vector<64x32xf32>, vector<16x32xf32> -> vector<16x32xf32>
    %c0_22 = arith.constant 0 : index
    %c0_23 = arith.constant 0 : index
    %34 = vector.load %arg9[%c0_22, %c0_23] : memref<32x32xf32, #tpu.memory_space<vmem>>, vector<32x32xf32>
    %cst_24 = arith.constant dense<0.000000e+00> : vector<16x32xf32>
    %35 = tpu.matmul %33, %34, %cst_24 {dimension_numbers = #tpu.dot_dimension_numbers<[1], [0], [0], [1], [0, 0, 1, 1], [], []>} : vector<16x32xf32>, vector<32x32xf32>, vector<16x32xf32> -> vector<16x32xf32>
    %c0_25 = arith.constant 0 : index
    %c0_26 = arith.constant 0 : index
    %36 = vector.load %arg10[%c0_25, %c0_26] : memref<1x32xf32, #tpu.memory_space<vmem>>, vector<1x32xf32>
    %37 = vector.broadcast %36 : vector<1x32xf32> to vector<16x32xf32>
    %38 = arith.addf %35, %37 : vector<16x32xf32>
    %c0_27 = arith.constant 0 : index
    %c0_28 = arith.constant 0 : index
    %c0_29 = arith.constant 0 : index
    %39 = vector.load %arg11[%c0_27, %c0_28, %c0_29] : memref<1x16x32xf32, #tpu.memory_space<vmem>>, vector<1x16x32xf32>
    %40 = vector.shape_cast %39 : vector<1x16x32xf32> to vector<16x32xf32>
    %41 = vector.shape_cast %38 : vector<16x32xf32> to vector<1x16x32xf32>
    tpu.vector_store %arg11[%c0_27, %c0_28, %c0_29], %41 {strides = array<i32>} : memref<1x16x32xf32, #tpu.memory_space<vmem>>, vector<1x16x32xf32>,
    return
  }
  func.func @transform_0(%arg0: i32) -> (i32, i32, i32) {
    %c0_i32 = arith.constant 0 : i32
    %c0_i32_0 = arith.constant 0 : i32
    %c0_i32_1 = arith.constant 0 : i32
    return %arg0, %c0_i32, %c0_i32_0 : i32, i32, i32
  }
  func.func @transform_1(%arg0: i32) -> (i32, i32, i32) {
    %c0_i32 = arith.constant 0 : i32
    %c0_i32_0 = arith.constant 0 : i32
    %c0_i32_1 = arith.constant 0 : i32
    return %arg0, %c0_i32, %c0_i32_0 : i32, i32, i32
  }
  func.func @transform_2(%arg0: i32) -> (i32, i32) {
    %c0_i32 = arith.constant 0 : i32
    %c0_i32_0 = arith.constant 0 : i32
    %c0_i32_1 = arith.constant 0 : i32
    return %c0_i32, %c0_i32_0 : i32, i32
  }
  func.func @transform_3(%arg0: i32) -> (i32, i32) {
    %c0_i32 = arith.constant 0 : i32
    %c0_i32_0 = arith.constant 0 : i32
    %c0_i32_1 = arith.constant 0 : i32
    return %c0_i32, %c0_i32_0 : i32, i32
  }
  func.func @transform_4(%arg0: i32) -> (i32, i32) {
    %c0_i32 = arith.constant 0 : i32
    %c0_i32_0 = arith.constant 0 : i32
    %c0_i32_1 = arith.constant 0 : i32
    return %c0_i32, %c0_i32_0 : i32, i32
  }
  func.func @transform_5(%arg0: i32) -> (i32, i32) {
    %c0_i32 = arith.constant 0 : i32
    %c0_i32_0 = arith.constant 0 : i32
    %c0_i32_1 = arith.constant 0 : i32
    return %c0_i32, %c0_i32_0 : i32, i32
  }
  func.func @transform_6(%arg0: i32) -> (i32, i32) {
    %c0_i32 = arith.constant 0 : i32
    %c0_i32_0 = arith.constant 0 : i32
    %c0_i32_1 = arith.constant 0 : i32
    return %c0_i32, %c0_i32_0 : i32, i32
  }
  func.func @transform_7(%arg0: i32) -> (i32, i32) {
    %c0_i32 = arith.constant 0 : i32
    %c0_i32_0 = arith.constant 0 : i32
    %c0_i32_1 = arith.constant 0 : i32
    return %c0_i32, %c0_i32_0 : i32, i32
  }
  func.func @transform_8(%arg0: i32) -> (i32, i32) {
    %c0_i32 = arith.constant 0 : i32
    %c0_i32_0 = arith.constant 0 : i32
    %c0_i32_1 = arith.constant 0 : i32
    return %c0_i32, %c0_i32_0 : i32, i32
  }
  func.func @transform_9(%arg0: i32) -> (i32, i32) {
    %c0_i32 = arith.constant 0 : i32
    %c0_i32_0 = arith.constant 0 : i32
    %c0_i32_1 = arith.constant 0 : i32
    return %c0_i32, %c0_i32_0 : i32, i32
  }
  func.func @transform_10(%arg0: i32) -> (i32, i32, i32) {
    %c0_i32 = arith.constant 0 : i32
    %c0_i32_0 = arith.constant 0 : i32
    %c0_i32_1 = arith.constant 0 : i32
    return %arg0, %c0_i32, %c0_i32_0 : i32, i32, i32
  }
}

</mosaic_0001>

<llo_original>
// kernel: ga_mhatt_forward.1
$region0: #{ga_mhatt_forward.1}
  #allocation0 [shape = 'u32[]', space=smem, size = 0x4, offset = 0x4, fixed_abs, tag = 'smem constant byte address 0x4 - core index']
  #allocation1 [shape = 'u32[144,128]{1,0:T(1,128)}', space=vmem, size = 0x12000, scoped, tag = 'internal scratch']
  %s0 = inlined_call_operand.vmem [shape: f32[2,16,96], index: 0, kind: input, shape index: {}]
  %s1 = inlined_call_operand.vmem [shape: f32[2,1,64], index: 1, kind: input, shape index: {}]
  %s2 = inlined_call_operand.vmem [shape: f32[96,96], index: 2, kind: input, shape index: {}]
  %s3 = inlined_call_operand.vmem [shape: f32[1,96], index: 3, kind: input, shape index: {}]
  %s4 = inlined_call_operand.vmem [shape: f32[64,32], index: 4, kind: input, shape index: {}]
  %s5 = inlined_call_operand.vmem [shape: f32[16,64], index: 5, kind: input, shape index: {}]
  %s6 = inlined_call_operand.vmem [shape: f32[64,4], index: 6, kind: input, shape index: {}]
  %s7 = inlined_call_operand.vmem [shape: f32[4,64], index: 7, kind: input, shape index: {}]
  %s8 = inlined_call_operand.vmem [shape: f32[32,32], index: 8, kind: input, shape index: {}]
  %s9 = inlined_call_operand.vmem [shape: f32[1,32], index: 9, kind: input, shape index: {}]
  %s10 = inlined_call_operand.hbm [shape: f32[2,16,32], index: 10, kind: output, shape index: {}]
  %s11 = sld [smem:[#allocation0]]
  $region73: #{ga_mhatt_forward.1} parent=0
    _
  %s13 = ssub.s32 1, %s11
  %s14 = scalar_select 0, %s13, %s11
  $region1: #{ga_mhatt_forward.1} parent=0
    #allocation2 [shape = 'u8[16384]{0}', space=vmem, size = 0x4000, scoped, tag = 'output window, operand 0']
    #allocation3 [shape = 's32[2]{0}', space=sflag, size = 0x8, scoped, tag = 'scoped memory for ga_mhatt_forward.1']
    %15 = vsyncpa [#allocation3], 0
    %s16 = scalar_lea.sflag [#allocation3], 1
    %17 = vsyncpa %s16, 0
    loop: start=0, step=1, limit=4
    $region2: #{ga_mhatt_forward.1} parent=1 // loop_pre_header
      _
    $region3: #{ga_mhatt_forward.1} parent=1 // loop_header
      %s19 = sphi 0, %s23
      %p20 = scmp.ge.s32.totalorder %s19, 4
      %s29 = sphi 0, %s31
      %s32 = sphi 0, %s29
      %s33 = sphi 0, %s32
      %s49 = sphi 0, %s33
      %s55 = sphi 0, %s57
      %s58 = sphi 0, %s55
      %s59 = sphi 0, %s58
      %s75 = sphi 0, %s59
      %s79 = sphi 0, %s79
      %s81 = sphi 0, %s79
      %s82 = sphi 0, %s81
      %s96 = sphi 0, %s82
      %s100 = sphi 0, %s100
      %s102 = sphi 0, %s100
      %s103 = sphi 0, %s102
      %s117 = sphi 0, %s103
      %s121 = sphi 0, %s121
      %s123 = sphi 0, %s121
      %s124 = sphi 0, %s123
      %s138 = sphi 0, %s124
      %s142 = sphi 0, %s142
      %s144 = sphi 0, %s142
      %s145 = sphi 0, %s144
      %s159 = sphi 0, %s145
      %s163 = sphi 0, %s163
      %s165 = sphi 0, %s163
      %s166 = sphi 0, %s165
      %s180 = sphi 0, %s166
      %s184 = sphi 0, %s184
      %s186 = sphi 0, %s184
      %s187 = sphi 0, %s186
      %s201 = sphi 0, %s187
      %s205 = sphi 0, %s205
      %s207 = sphi 0, %s205
      %s208 = sphi 0, %s207
      %s222 = sphi 0, %s208
      %s226 = sphi 0, %s226
      %s228 = sphi 0, %s226
      %s229 = sphi 0, %s228
      %s243 = sphi 0, %s229
      %s249 = sphi 0, %s251
      %s252 = sphi 0, %s249
      %s253 = sphi 0, %s252
      %s269 = sphi 0, %s253
    $region4: #{ga_mhatt_forward.1} parent=1 // loop_header_branch
      %22 = sbr.rel (%p20) target = $region8
    $region5: #{ga_mhatt_forward.1} parent=1 // loop_body
      %s24 = ssub.s32 %s19, 1
      %s25 = ssub.s32 %s19, 2
      %s26 = sadd.s32 %s19, 1
      %s27 = ssub.s32 %s19, %s26
      %p28 = scmp.eq.s32.totalorder %s27, 0
      %s30 = sadd.s32 %s29, 1
      %s31 = scalar_select %p28, %s29, %s30
      %p34 = pneg %p28
      %p35 = scmp.eq.s32.totalorder %s19, 1
      %p36 = por %p34, %p35
      %p37 = scmp.ne.s32.totalorder %s29, %s32
      %p38 = scmp.eq.s32.totalorder %s19, 0
      %p39 = por %p37, %p38
      %p40 = scmp.ne.s32.totalorder %s29, %s32
      %p41 = scmp.eq.s32.totalorder %s24, 1
      %p42 = por %p40, %p41
      %p43 = scmp.ne.s32.totalorder %s32, %s33
      %p44 = scmp.eq.s32.totalorder %s24, 0
      %p45 = por %p43, %p44
      %p46 = scmp.ne.s32.totalorder %s32, %s33
      %p47 = scmp.eq.s32.totalorder %s25, 1
      %p48 = por %p46, %p47
      %p50 = scmp.ne.s32.totalorder %s33, %s49
      %p51 = scmp.eq.s32.totalorder %s25, 0
      %p52 = por %p50, %p51
      %s53 = ssub.s32 %s19, %s26
      %p54 = scmp.eq.s32.totalorder %s53, 0
      %s56 = sadd.s32 %s55, 1
      %s57 = scalar_select %p54, %s55, %s56
      %p60 = pneg %p54
      %p61 = scmp.eq.s32.totalorder %s19, 1
      %p62 = por %p60, %p61
      %p63 = scmp.ne.s32.totalorder %s55, %s58
      %p64 = scmp.eq.s32.totalorder %s19, 0
      %p65 = por %p63, %p64
      %p66 = scmp.ne.s32.totalorder %s55, %s58
      %p67 = scmp.eq.s32.totalorder %s24, 1
      %p68 = por %p66, %p67
      %p69 = scmp.ne.s32.totalorder %s58, %s59
      %p70 = scmp.eq.s32.totalorder %s24, 0
      %p71 = por %p69, %p70
      %p72 = scmp.ne.s32.totalorder %s58, %s59
      %p73 = scmp.eq.s32.totalorder %s25, 1
      %p74 = por %p72, %p73
      %p76 = scmp.ne.s32.totalorder %s59, %s75
      %p77 = scmp.eq.s32.totalorder %s25, 0
      %p78 = por %p76, %p77
      %s80 = sadd.s32 %s79, 1
      %p83 = scmp.eq.s32.totalorder %s19, 1
      %p84 = scmp.ne.s32.totalorder %s79, %s81
      %p85 = scmp.eq.s32.totalorder %s19, 0
      %p86 = por %p84, %p85
      %p87 = scmp.ne.s32.totalorder %s79, %s81
      %p88 = scmp.eq.s32.totalorder %s24, 1
      %p89 = por %p87, %p88
      %p90 = scmp.ne.s32.totalorder %s81, %s82
      %p91 = scmp.eq.s32.totalorder %s24, 0
      %p92 = por %p90, %p91
      %p93 = scmp.ne.s32.totalorder %s81, %s82
      %p94 = scmp.eq.s32.totalorder %s25, 1
      %p95 = por %p93, %p94
      %p97 = scmp.ne.s32.totalorder %s82, %s96
      %p98 = scmp.eq.s32.totalorder %s25, 0
      %p99 = por %p97, %p98
      %s101 = sadd.s32 %s100, 1
      %p104 = scmp.eq.s32.totalorder %s19, 1
      %p105 = scmp.ne.s32.totalorder %s100, %s102
      %p106 = scmp.eq.s32.totalorder %s19, 0
      %p107 = por %p105, %p106
      %p108 = scmp.ne.s32.totalorder %s100, %s102
      %p109 = scmp.eq.s32.totalorder %s24, 1
      %p110 = por %p108, %p109
      %p111 = scmp.ne.s32.totalorder %s102, %s103
      %p112 = scmp.eq.s32.totalorder %s24, 0
      %p113 = por %p111, %p112
      %p114 = scmp.ne.s32.totalorder %s102, %s103
      %p115 = scmp.eq.s32.totalorder %s25, 1
      %p116 = por %p114, %p115
      %p118 = scmp.ne.s32.totalorder %s103, %s117
      %p119 = scmp.eq.s32.totalorder %s25, 0
      %p120 = por %p118, %p119
      %s122 = sadd.s32 %s121, 1
      %p125 = scmp.eq.s32.totalorder %s19, 1
      %p126 = scmp.ne.s32.totalorder %s121, %s123
      %p127 = scmp.eq.s32.totalorder %s19, 0
      %p128 = por %p126, %p127
      %p129 = scmp.ne.s32.totalorder %s121, %s123
      %p130 = scmp.eq.s32.totalorder %s24, 1
      %p131 = por %p129, %p130
      %p132 = scmp.ne.s32.totalorder %s123, %s124
      %p133 = scmp.eq.s32.totalorder %s24, 0
      %p134 = por %p132, %p133
      %p135 = scmp.ne.s32.totalorder %s123, %s124
      %p136 = scmp.eq.s32.totalorder %s25, 1
      %p137 = por %p135, %p136
      %p139 = scmp.ne.s32.totalorder %s124, %s138
      %p140 = scmp.eq.s32.totalorder %s25, 0
      %p141 = por %p139, %p140
      %s143 = sadd.s32 %s142, 1
      %p146 = scmp.eq.s32.totalorder %s19, 1
      %p147 = scmp.ne.s32.totalorder %s142, %s144
      %p148 = scmp.eq.s32.totalorder %s19, 0
      %p149 = por %p147, %p148
      %p150 = scmp.ne.s32.totalorder %s142, %s144
      %p151 = scmp.eq.s32.totalorder %s24, 1
      %p152 = por %p150, %p151
      %p153 = scmp.ne.s32.totalorder %s144, %s145
      %p154 = scmp.eq.s32.totalorder %s24, 0
      %p155 = por %p153, %p154
      %p156 = scmp.ne.s32.totalorder %s144, %s145
      %p157 = scmp.eq.s32.totalorder %s25, 1
      %p158 = por %p156, %p157
      %p160 = scmp.ne.s32.totalorder %s145, %s159
      %p161 = scmp.eq.s32.totalorder %s25, 0
      %p162 = por %p160, %p161
      %s164 = sadd.s32 %s163, 1
      %p167 = scmp.eq.s32.totalorder %s19, 1
      %p168 = scmp.ne.s32.totalorder %s163, %s165
      %p169 = scmp.eq.s32.totalorder %s19, 0
      %p170 = por %p168, %p169
      %p171 = scmp.ne.s32.totalorder %s163, %s165
      %p172 = scmp.eq.s32.totalorder %s24, 1
      %p173 = por %p171, %p172
      %p174 = scmp.ne.s32.totalorder %s165, %s166
      %p175 = scmp.eq.s32.totalorder %s24, 0
      %p176 = por %p174, %p175
      %p177 = scmp.ne.s32.totalorder %s165, %s166
      %p178 = scmp.eq.s32.totalorder %s25, 1
      %p179 = por %p177, %p178
      %p181 = scmp.ne.s32.totalorder %s166, %s180
      %p182 = scmp.eq.s32.totalorder %s25, 0
      %p183 = por %p181, %p182
      %s185 = sadd.s32 %s184, 1
      %p188 = scmp.eq.s32.totalorder %s19, 1
      %p189 = scmp.ne.s32.totalorder %s184, %s186
      %p190 = scmp.eq.s32.totalorder %s19, 0
      %p191 = por %p189, %p190
      %p192 = scmp.ne.s32.totalorder %s184, %s186
      %p193 = scmp.eq.s32.totalorder %s24, 1
      %p194 = por %p192, %p193
      %p195 = scmp.ne.s32.totalorder %s186, %s187
      %p196 = scmp.eq.s32.totalorder %s24, 0
      %p197 = por %p195, %p196
      %p198 = scmp.ne.s32.totalorder %s186, %s187
      %p199 = scmp.eq.s32.totalorder %s25, 1
      %p200 = por %p198, %p199
      %p202 = scmp.ne.s32.totalorder %s187, %s201
      %p203 = scmp.eq.s32.totalorder %s25, 0
      %p204 = por %p202, %p203
      %s206 = sadd.s32 %s205, 1
      %p209 = scmp.eq.s32.totalorder %s19, 1
      %p210 = scmp.ne.s32.totalorder %s205, %s207
      %p211 = scmp.eq.s32.totalorder %s19, 0
      %p212 = por %p210, %p211
      %p213 = scmp.ne.s32.totalorder %s205, %s207
      %p214 = scmp.eq.s32.totalorder %s24, 1
      %p215 = por %p213, %p214
      %p216 = scmp.ne.s32.totalorder %s207, %s208
      %p217 = scmp.eq.s32.totalorder %s24, 0
      %p218 = por %p216, %p217
      %p219 = scmp.ne.s32.totalorder %s207, %s208
      %p220 = scmp.eq.s32.totalorder %s25, 1
      %p221 = por %p219, %p220
      %p223 = scmp.ne.s32.totalorder %s208, %s222
      %p224 = scmp.eq.s32.totalorder %s25, 0
      %p225 = por %p223, %p224
      %s227 = sadd.s32 %s226, 1
      %p230 = scmp.eq.s32.totalorder %s19, 1
      %p231 = scmp.ne.s32.totalorder %s226, %s228
      %p232 = scmp.eq.s32.totalorder %s19, 0
      %p233 = por %p231, %p232
      %p234 = scmp.ne.s32.totalorder %s226, %s228
      %p235 = scmp.eq.s32.totalorder %s24, 1
      %p236 = por %p234, %p235
      %p237 = scmp.ne.s32.totalorder %s228, %s229
      %p238 = scmp.eq.s32.totalorder %s24, 0
      %p239 = por %p237, %p238
      %p240 = scmp.ne.s32.totalorder %s228, %s229
      %p241 = scmp.eq.s32.totalorder %s25, 1
      %p242 = por %p240, %p241
      %p244 = scmp.ne.s32.totalorder %s229, %s243
      %p245 = scmp.eq.s32.totalorder %s25, 0
      %p246 = por %p244, %p245
      %s247 = ssub.s32 %s19, %s26
      %p248 = scmp.eq.s32.totalorder %s247, 0
      %s250 = sadd.s32 %s249, 1
      %s251 = scalar_select %p248, %s249, %s250
      %p254 = pneg %p248
      %p255 = scmp.eq.s32.totalorder %s19, 1
      %p256 = por %p254, %p255
      %p257 = scmp.ne.s32.totalorder %s249, %s252
      %p258 = scmp.eq.s32.totalorder %s19, 0
      %p259 = por %p257, %p258
      %p260 = scmp.ne.s32.totalorder %s249, %s252
      %p261 = scmp.eq.s32.totalorder %s24, 1
      %p262 = por %p260, %p261
      %p263 = scmp.ne.s32.totalorder %s252, %s253
      %p264 = scmp.eq.s32.totalorder %s24, 0
      %p265 = por %p263, %p264
      %p266 = scmp.ne.s32.totalorder %s252, %s253
      %p267 = scmp.eq.s32.totalorder %s25, 1
      %p268 = por %p266, %p267
      %p270 = scmp.ne.s32.totalorder %s253, %s269
      %p271 = scmp.eq.s32.totalorder %s25, 0
      %p272 = por %p270, %p271
      %p273 = scmp.le.s32.totalorder 1, %s19
      %p274 = scmp.lt.s32.totalorder %s19, 3
      %p275 = pnand %p273, %p274
      %p276 = pneg %p275
      // Predicated region
      $region9: #{ga_mhatt_forward.1} parent=5 // pred_check
        _
      $region10: #{ga_mhatt_forward.1} parent=5 // pred_check_branch
        %278 = sbr.rel (%p275) target = $region12
      $region11: #{ga_mhatt_forward.1} parent=5 // pred_region
        %s279 = ssub.s32 %s19, 1
        // Predicated region
        $region13: #{ga_mhatt_forward.1} parent=11 // pred_check
          %p280 = pneg %p92
        $region14: #{ga_mhatt_forward.1} parent=11 // pred_check_branch
          %282 = sbr.rel (%p280) target = $region16
        $region15: #{ga_mhatt_forward.1} parent=11 // pred_region
          _
        $region16: #{ga_mhatt_forward.1} parent=11 // pred_fallthru
          _
        // Predicated region
        $region17: #{ga_mhatt_forward.1} parent=11 // pred_check
          %p283 = pneg %p113
        $region18: #{ga_mhatt_forward.1} parent=11 // pred_check_branch
          %285 = sbr.rel (%p283) target = $region20
        $region19: #{ga_mhatt_forward.1} parent=11 // pred_region
          _
        $region20: #{ga_mhatt_forward.1} parent=11 // pred_fallthru
          _
        // Predicated region
        $region21: #{ga_mhatt_forward.1} parent=11 // pred_check
          %p286 = pneg %p134
        $region22: #{ga_mhatt_forward.1} parent=11 // pred_check_branch
          %288 = sbr.rel (%p286) target = $region24
        $region23: #{ga_mhatt_forward.1} parent=11 // pred_region
          _
        $region24: #{ga_mhatt_forward.1} parent=11 // pred_fallthru
          _
        // Predicated region
        $region25: #{ga_mhatt_forward.1} parent=11 // pred_check
          %p289 = pneg %p155
        $region26: #{ga_mhatt_forward.1} parent=11 // pred_check_branch
          %291 = sbr.rel (%p289) target = $region28
        $region27: #{ga_mhatt_forward.1} parent=11 // pred_region
          _
        $region28: #{ga_mhatt_forward.1} parent=11 // pred_fallthru
          _
        // Predicated region
        $region29: #{ga_mhatt_forward.1} parent=11 // pred_check
          %p292 = pneg %p176
        $region30: #{ga_mhatt_forward.1} parent=11 // pred_check_branch
          %294 = sbr.rel (%p292) target = $region32
        $region31: #{ga_mhatt_forward.1} parent=11 // pred_region
          _
        $region32: #{ga_mhatt_forward.1} parent=11 // pred_fallthru
          _
        // Predicated region
        $region33: #{ga_mhatt_forward.1} parent=11 // pred_check
          %p295 = pneg %p197
        $region34: #{ga_mhatt_forward.1} parent=11 // pred_check_branch
          %297 = sbr.rel (%p295) target = $region36
        $region35: #{ga_mhatt_forward.1} parent=11 // pred_region
          _
        $region36: #{ga_mhatt_forward.1} parent=11 // pred_fallthru
          _
        // Predicated region
        $region37: #{ga_mhatt_forward.1} parent=11 // pred_check
          %p298 = pneg %p218
        $region38: #{ga_mhatt_forward.1} parent=11 // pred_check_branch
          %300 = sbr.rel (%p298) target = $region40
        $region39: #{ga_mhatt_forward.1} parent=11 // pred_region
          _
        $region40: #{ga_mhatt_forward.1} parent=11 // pred_fallthru
          _
        // Predicated region
        $region41: #{ga_mhatt_forward.1} parent=11 // pred_check
          %p301 = pneg %p239
        $region42: #{ga_mhatt_forward.1} parent=11 // pred_check_branch
          %303 = sbr.rel (%p301) target = $region44
        $region43: #{ga_mhatt_forward.1} parent=11 // pred_region
          _
        $region44: #{ga_mhatt_forward.1} parent=11 // pred_fallthru
          _
      $region12: #{ga_mhatt_forward.1} parent=5 // pred_fallthru
        _
      %p304 = scmp.lt.s32.totalorder %s19, 2
      // Predicated region
      $region45: #{ga_mhatt_forward.1} parent=5 // pred_check
        %p305 = pneg %p304
      $region46: #{ga_mhatt_forward.1} parent=5 // pred_check_branch
        %307 = sbr.rel (%p305) target = $region48
      $region47: #{ga_mhatt_forward.1} parent=5 // pred_region
        // Predicated region
        $region49: #{ga_mhatt_forward.1} parent=47 // pred_check
          %p308 = pneg %p39
        $region50: #{ga_mhatt_forward.1} parent=47 // pred_check_branch
          %310 = sbr.rel (%p308) target = $region52
        $region51: #{ga_mhatt_forward.1} parent=47 // pred_region
          %p311 = scmp.lt.s32.totalorder %s19, 1
          %s312 = scalar_select %p311, %s19, 1
          %s313 = smul.addr %s312, 2
          %s314 = smul.addr %s313, 8
          %s315 = scalar_lea.vmem %s0, %s314
        $region52: #{ga_mhatt_forward.1} parent=47 // pred_fallthru
          _
        // Predicated region
        $region53: #{ga_mhatt_forward.1} parent=47 // pred_check
          %p316 = pneg %p65
        $region54: #{ga_mhatt_forward.1} parent=47 // pred_check_branch
          %318 = sbr.rel (%p316) target = $region56
        $region55: #{ga_mhatt_forward.1} parent=47 // pred_region
          %p319 = scmp.lt.s32.totalorder %s19, 1
          %s320 = scalar_select %p319, %s19, 1
          %s321 = scalar_lea.vmem %s1, %s320
        $region56: #{ga_mhatt_forward.1} parent=47 // pred_fallthru
          _
      $region48: #{ga_mhatt_forward.1} parent=5 // pred_fallthru
        _
      %p322 = scmp.le.s32.totalorder 1, %s19
      %p323 = scmp.lt.s32.totalorder %s19, 3
      %p324 = pnand %p322, %p323
      %p325 = pneg %p324
      // Predicated region
      $region57: #{ga_mhatt_forward.1} parent=5 // pred_check
        _
      $region58: #{ga_mhatt_forward.1} parent=5 // pred_check_branch
        %327 = sbr.rel (%p324) target = $region60
      $region59: #{ga_mhatt_forward.1} parent=5 // pred_region
        %s328 = ssub.s32 %s19, 1
        %p329 = scmp.lt.s32.totalorder %s24, 1
        %s330 = scalar_select %p329, %s24, 1
        %s331 = smul.addr %s330, 2
        %s332 = smul.addr %s331, 8
        %s333 = scalar_lea.vmem %s0, %s332
        %p334 = pneg %p45
        %p335 = pneg %p42
        %p336 = scmp.lt.s32.totalorder %s24, 1
        %s337 = scalar_select %p336, %s24, 1
        %s338 = scalar_lea.vmem %s1, %s337
        %p339 = pneg %p71
        %p340 = pneg %p68
        %p341 = pneg %p92
        %p342 = pneg %p89
        %p343 = pneg %p113
        %p344 = pneg %p110
        %p345 = pneg %p134
        %p346 = pneg %p131
        %p347 = pneg %p155
        %p348 = pneg %p152
        %p349 = pneg %p176
        %p350 = pneg %p173
        %p351 = pneg %p197
        %p352 = pneg %p194
        %p353 = pneg %p218
        %p354 = pneg %p215
        %p355 = pneg %p239
        %p356 = pneg %p236
        %p357 = pneg %p265
        %p358 = pneg %p262
        %s359 = sand.u32 %s252, 1
        %s360 = scalar_lea.sflag [#allocation3], %s359
        %s361 = sand.u32 %s252, 1
        %s362 = smul.addr %s361, 16
        %s363 = scalar_lea.vmem [#allocation2], %s362
        %p364 = scmp.lt.s32.totalorder %s24, 1
        %s365 = scalar_select %p364, %s24, 1
        %s366 = smul.addr %s365, 2
        %s367 = smul.addr %s366, 8
        %s368 = scalar_lea.vmem %s0, %s367
        %p369 = scmp.lt.s32.totalorder %s24, 1
        %s370 = scalar_select %p369, %s24, 1
        %s371 = scalar_lea.vmem %s1, %s370
        %v372 = vld [vmem:[%s368] sm:$0xff]
        %v373 = vld [vmem:[%s368 + $0x8] sm:$0xff]
        %v374 = vld [vmem:[%s2] sm:$0xff]
        %v375 = vld [vmem:[%s2 + $0x8] sm:$0xff]
        %v376 = vld [vmem:[%s2 + $0x10] sm:$0xff]
        %v377 = vld [vmem:[%s2 + $0x18] sm:$0xff]
        %v378 = vld [vmem:[%s2 + $0x20] sm:$0xff]
        %v379 = vld [vmem:[%s2 + $0x28] sm:$0xff]
        %v380 = vld [vmem:[%s2 + $0x30] sm:$0xff]
        %v381 = vld [vmem:[%s2 + $0x38] sm:$0xff]
        %v382 = vld [vmem:[%s2 + $0x40] sm:$0xff]
        %v383 = vld [vmem:[%s2 + $0x48] sm:$0xff]
        %v384 = vld [vmem:[%s2 + $0x50] sm:$0xff]
        %v385 = vld [vmem:[%s2 + $0x58] sm:$0xff]
        %v386 = vld [vmem:[%s3] sm:$0x1]
        %v388 = vlaneseq
        %v389 = vshrl.u32 %v388, 7
        %v390 = vsub.s32 0, %v389
        %v391 = vrot.slane %v386, %v390
        %vm393 = vcmask 785408
        %v395 = vsel %vm393, %v372, 0
        %v398 = vsel %vm393, %v373, 0
        %400 = vmatprep.subr.mxu0 0.0
        %401 = vmatpush1.msra.mxu0 0.0
        %402 = vmatprep.subr.mxu0 0.0
        %403 = vmatpush1.msra.mxu0 0.0
        %404 = vmatprep.subr.mxu0 0.0
        %405 = vmatpush1.msra.mxu0 0.0
        %406 = vmatprep.subr.mxu0 0.0
        %407 = vmatpush1.msra.mxu0 0.0
        %408 = vmatprep.subr.mxu0 0.0
        %409 = vmatpush1.msra.mxu0 %v385
        %410 = vmatprep.subr.mxu0 0.0
        %411 = vmatpush1.msra.mxu0 %v384
        %412 = vmatprep.subr.mxu0 0.0
        %413 = vmatpush1.msra.mxu0 %v383
        %414 = vmatprep.subr.mxu0 0.0
        %415 = vmatpush1.msra.mxu0 %v382
        %416 = vmatprep.subr.mxu0 0.0
        %417 = vmatpush1.msra.mxu0 %v381
        %418 = vmatprep.subr.mxu0 0.0
        %419 = vmatpush1.msra.mxu0 %v380
        %420 = vmatprep.subr.mxu0 0.0
        %421 = vmatpush1.msra.mxu0 %v379
        %422 = vmatprep.subr.mxu0 0.0
        %423 = vmatpush1.msra.mxu0 %v378
        %424 = vmatprep.subr.mxu0 0.0
        %425 = vmatpush1.msra.mxu0 %v377
        %426 = vmatprep.subr.mxu0 0.0
        %427 = vmatpush1.msra.mxu0 %v376
        %428 = vmatprep.subr.mxu0 0.0
        %429 = vmatpush1.msra.mxu0 %v375
        %430 = vmatprep.subr.mxu0 0.0
        %431 = vmatpush1.msra.mxu0 %v374
        %432 = vmatprep.subr.mxu0 0.0
        %433 = vmatpush2.msra.mxu0 0.0
        %434 = vmatprep.subr.mxu0 0.0
        %435 = vmatpush2.msra.mxu0 0.0
        %436 = vmatprep.subr.mxu0 0.0
        %437 = vmatpush2.msra.mxu0 0.0
        %438 = vmatprep.subr.mxu0 0.0
        %439 = vmatpush2.msra.mxu0 0.0
        %440 = vmatprep.subr.mxu0 0.0
        %441 = vmatpush2.msra.mxu0 0.0
        %442 = vmatprep.subr.mxu0 0.0
        %443 = vmatpush2.msra.mxu0 0.0
        %444 = vmatprep.subr.mxu0 0.0
        %445 = vmatpush2.msra.mxu0 0.0
        %446 = vmatprep.subr.mxu0 0.0
        %447 = vmatpush2.msra.mxu0 0.0
        %448 = vmatprep.subr.mxu0 0.0
        %449 = vmatpush2.msra.mxu0 0.0
        %450 = vmatprep.subr.mxu0 0.0
        %451 = vmatpush2.msra.mxu0 0.0
        %452 = vmatprep.subr.mxu0 0.0
        %453 = vmatpush2.msra.mxu0 0.0
        %454 = vmatprep.subr.mxu0 0.0
        %455 = vmatpush2.msra.mxu0 0.0
        %456 = vmatprep.subr.mxu0 0.0
        %457 = vmatpush2.msra.mxu0 0.0
        %458 = vmatprep.subr.mxu0 0.0
        %459 = vmatpush2.msra.mxu0 0.0
        %460 = vmatprep.subr.mxu0 0.0
        %461 = vmatpush2.msra.mxu0 0.0
        %462 = vmatprep.subr.mxu0 0.0
        %463 = vmatpush2.msra.mxu0 0.0
        %464 = vmatprep.mubr.f32.mxu0 0.0
        %465 = vmatmul.mubr.f32.gmra.mxu0 %v395
        %v466 = vpop.f32.mrf.mxu0
        %v467 = vadd.f32 %v391, %v466
        %v468 = vpop.f32.mrf.mxu0
        %469 = vmatprep.mubr.f32.mxu0 0.0
        %470 = vmatmul.mubr.f32.gmra.mxu0 %v398
        %v471 = vpop.f32.mrf.mxu0
        %v472 = vadd.f32 %v391, %v471
        %v473 = vpop.f32.mrf.mxu0
        %474 = vdwg.mxu0
        %v475 = vld [vmem:[%s4] sm:$0xff]
        %v476 = vld [vmem:[%s4 + $0x8] sm:$0xff]
        %v477 = vld [vmem:[%s4 + $0x10] sm:$0xff]
        %v478 = vld [vmem:[%s4 + $0x18] sm:$0xff]
        %v479 = vld [vmem:[%s4 + $0x20] sm:$0xff]
        %v480 = vld [vmem:[%s4 + $0x28] sm:$0xff]
        %v481 = vld [vmem:[%s4 + $0x30] sm:$0xff]
        %v482 = vld [vmem:[%s4 + $0x38] sm:$0xff]
        %491 = vrot.lane.b32.xlu0 %v475, 32
        %v492 = vpop.permute.xlu0 %491
        %493 = vrot.lane.b32.xlu0 %v476, 32
        %v494 = vpop.permute.xlu0 %493
        %495 = vrot.lane.b32.xlu0 %v477, 32
        %v496 = vpop.permute.xlu0 %495
        %497 = vrot.lane.b32.xlu0 %v478, 32
        %v498 = vpop.permute.xlu0 %497
        %499 = vrot.lane.b32.xlu0 %v479, 32
        %v500 = vpop.permute.xlu0 %499
        %501 = vrot.lane.b32.xlu0 %v480, 32
        %v502 = vpop.permute.xlu0 %501
        %503 = vrot.lane.b32.xlu0 %v481, 32
        %v504 = vpop.permute.xlu0 %503
        %505 = vrot.lane.b32.xlu0 %v482, 32
        %v506 = vpop.permute.xlu0 %505
        %v515 = vmul.f32 %v467, %v492
        %v516 = vmul.f32 %v472, %v494
        %v517 = vmul.f32 %v467, %v496
        %v518 = vmul.f32 %v472, %v498
        %v519 = vmul.f32 %v467, %v500
        %v520 = vmul.f32 %v472, %v502
        %v521 = vmul.f32 %v467, %v504
        %v522 = vmul.f32 %v472, %v506
        %v523 = vmul.f32 %v467, %v475
        %v524 = vmul.f32 %v472, %v476
        %v525 = vmul.f32 %v467, %v477
        %v526 = vmul.f32 %v472, %v478
        %v527 = vmul.f32 %v467, %v479
        %v528 = vmul.f32 %v472, %v480
        %v529 = vmul.f32 %v467, %v481
        %v530 = vmul.f32 %v472, %v482
        %v531 = vld [vmem:[%s371] sm:$0x1]
        %v533 = vlaneseq
        %v534 = vshrl.u32 %v533, 7
        %v535 = vsub.s32 0, %v534
        %v536 = vrot.slane %v531, %v535
        %540 = vrot.lane.b32.xlu0 %v467, 64
        %v541 = vpop.permute.xlu0 %540
        %542 = vrot.lane.b32.xlu0 %v472, 64
        %v543 = vpop.permute.xlu0 %542
        %552 = vrot.lane.b32.xlu0 %v515, 96
        %v553 = vpop.permute.xlu0 %552
        %554 = vrot.lane.b32.xlu0 %v516, 96
        %v555 = vpop.permute.xlu0 %554
        %556 = vrot.lane.b32.xlu0 %v517, 96
        %v557 = vpop.permute.xlu0 %556
        %558 = vrot.lane.b32.xlu0 %v518, 96
        %v559 = vpop.permute.xlu0 %558
        %560 = vrot.lane.b32.xlu0 %v519, 96
        %v561 = vpop.permute.xlu0 %560
        %562 = vrot.lane.b32.xlu0 %v520, 96
        %v563 = vpop.permute.xlu0 %562
        %564 = vrot.lane.b32.xlu0 %v521, 96
        %v565 = vpop.permute.xlu0 %564
        %566 = vrot.lane.b32.xlu0 %v522, 96
        %v567 = vpop.permute.xlu0 %566
        %vm568 = vcmask 261120
        %v569 = vsel %vm568, %v541, 0
        %v571 = vsel %vm568, %v543, 0
        %v573 = vsel %vm568, %v553, 0
        %v575 = vsel %vm568, %v555, 0
        %v577 = vsel %vm568, %v557, 0
        %v579 = vsel %vm568, %v559, 0
        %v581 = vsel %vm568, %v561, 0
        %v583 = vsel %vm568, %v563, 0
        %v585 = vsel %vm568, %v565, 0
        %v587 = vsel %vm568, %v567, 0
        %589 = vmatprep.subr.mxu0 0.0
        %590 = vmatpush1.xpose.msra.mxu0 0.0
        %591 = vmatprep.subr.mxu0 0.0
        %592 = vmatpush1.xpose.msra.mxu0 0.0
        %593 = vmatprep.subr.mxu0 0.0
        %594 = vmatpush1.xpose.msra.mxu0 0.0
        %595 = vmatprep.subr.mxu0 0.0
        %596 = vmatpush1.xpose.msra.mxu0 0.0
        %597 = vmatprep.subr.mxu0 0.0
        %598 = vmatpush1.xpose.msra.mxu0 0.0
        %599 = vmatprep.subr.mxu0 0.0
        %600 = vmatpush1.xpose.msra.mxu0 0.0
        %601 = vmatprep.subr.mxu0 0.0
        %602 = vmatpush1.xpose.msra.mxu0 0.0
        %603 = vmatprep.subr.mxu0 0.0
        %604 = vmatpush1.xpose.msra.mxu0 0.0
        %605 = vmatprep.subr.mxu0 0.0
        %606 = vmatpush1.xpose.msra.mxu0 %v587
        %607 = vmatprep.subr.mxu0 0.0
        %608 = vmatpush1.xpose.msra.mxu0 %v585
        %609 = vmatprep.subr.mxu0 0.0
        %610 = vmatpush1.xpose.msra.mxu0 %v583
        %611 = vmatprep.subr.mxu0 0.0
        %612 = vmatpush1.xpose.msra.mxu0 %v581
        %613 = vmatprep.subr.mxu0 0.0
        %614 = vmatpush1.xpose.msra.mxu0 %v579
        %615 = vmatprep.subr.mxu0 0.0
        %616 = vmatpush1.xpose.msra.mxu0 %v577
        %617 = vmatprep.subr.mxu0 0.0
        %618 = vmatpush1.xpose.msra.mxu0 %v575
        %619 = vmatprep.subr.mxu0 0.0
        %620 = vmatpush1.xpose.msra.mxu0 %v573
        %621 = vmatprep.subr.mxu0 0.0
        %622 = vmatpush2.xpose.msra.mxu0 0.0
        %623 = vmatprep.subr.mxu0 0.0
        %624 = vmatpush2.xpose.msra.mxu0 0.0
        %625 = vmatprep.subr.mxu0 0.0
        %626 = vmatpush2.xpose.msra.mxu0 0.0
        %627 = vmatprep.subr.mxu0 0.0
        %628 = vmatpush2.xpose.msra.mxu0 0.0
        %629 = vmatprep.subr.mxu0 0.0
        %630 = vmatpush2.xpose.msra.mxu0 0.0
        %631 = vmatprep.subr.mxu0 0.0
        %632 = vmatpush2.xpose.msra.mxu0 0.0
        %633 = vmatprep.subr.mxu0 0.0
        %634 = vmatpush2.xpose.msra.mxu0 0.0
        %635 = vmatprep.subr.mxu0 0.0
        %636 = vmatpush2.xpose.msra.mxu0 0.0
        %637 = vmatprep.subr.mxu0 0.0
        %638 = vmatpush2.xpose.msra.mxu0 0.0
        %639 = vmatprep.subr.mxu0 0.0
        %640 = vmatpush2.xpose.msra.mxu0 0.0
        %641 = vmatprep.subr.mxu0 0.0
        %642 = vmatpush2.xpose.msra.mxu0 0.0
        %643 = vmatprep.subr.mxu0 0.0
        %644 = vmatpush2.xpose.msra.mxu0 0.0
        %645 = vmatprep.subr.mxu0 0.0
        %646 = vmatpush2.xpose.msra.mxu0 0.0
        %647 = vmatprep.subr.mxu0 0.0
        %648 = vmatpush2.xpose.msra.mxu0 0.0
        %649 = vmatprep.subr.mxu0 0.0
        %650 = vmatpush2.xpose.msra.mxu0 0.0
        %651 = vmatprep.subr.mxu0 0.0
        %652 = vmatpush2.xpose.msra.mxu0 0.0
        %653 = vmatprep.mubr.f32.mxu0 0.0
        %654 = vmatmul.mubr.f32.gmra.mxu0 %v569
        %v655 = vpop.f32.mrf.mxu0
        %v656 = vadd.f32 %v536, %v655
        %v657 = vpop.f32.mrf.mxu0
        %658 = vmatprep.mubr.f32.mxu0 0.0
        %659 = vmatmul.mubr.f32.gmra.mxu0 %v571
        %v660 = vpop.f32.mrf.mxu0
        %v661 = vadd.f32 %v536, %v660
        %v662 = vpop.f32.mrf.mxu0
        %663 = vdwg.mxu0
        %vm664 = vcmask 523264
        %v665 = vsel %vm664, %v656, -inf
        %666 = vmax.xlane.f32.xlu0 %v665
        %v667 = vpop.xlane.xlu0 %666
        %v668 = vsel %vm664, %v661, -inf
        %669 = vmax.xlane.f32.xlu0 %v668
        %v670 = vpop.xlane.xlu0 %669
        %v671 = vsub.f32 %v656, %v667
        %v672 = vsub.f32 %v661, %v670
        %v673 = vmul.f32 %v671, 1.442695
        %v674 = vpow.pop %v673
        %v675 = vmul.f32 %v672, 1.442695
        %v676 = vpow.pop %v675
        %v677 = vld [vmem:[%s6] sm:$0xff]
        %v678 = vld [vmem:[%s6 + $0x8] sm:$0xff]
        %v679 = vld [vmem:[%s6 + $0x10] sm:$0xff]
        %v680 = vld [vmem:[%s6 + $0x18] sm:$0xff]
        %v681 = vld [vmem:[%s6 + $0x20] sm:$0xff]
        %v682 = vld [vmem:[%s6 + $0x28] sm:$0xff]
        %v683 = vld [vmem:[%s6 + $0x30] sm:$0xff]
        %v684 = vld [vmem:[%s6 + $0x38] sm:$0xff]
        %v686 = vsel %vm664, %v674, 0
        %v689 = vsel %vm664, %v676, 0
        %691 = vmatprep.subr.mxu0 0.0
        %692 = vmatpush1.msra.mxu0 0.0
        %693 = vmatprep.subr.mxu0 0.0
        %694 = vmatpush1.msra.mxu0 0.0
        %695 = vmatprep.subr.mxu0 0.0
        %696 = vmatpush1.msra.mxu0 0.0
        %697 = vmatprep.subr.mxu0 0.0
        %698 = vmatpush1.msra.mxu0 0.0
        %699 = vmatprep.subr.mxu0 0.0
        %700 = vmatpush1.msra.mxu0 0.0
        %701 = vmatprep.subr.mxu0 0.0
        %702 = vmatpush1.msra.mxu0 0.0
        %703 = vmatprep.subr.mxu0 0.0
        %704 = vmatpush1.msra.mxu0 0.0
        %705 = vmatprep.subr.mxu0 0.0
        %706 = vmatpush1.msra.mxu0 0.0
        %707 = vmatprep.subr.mxu0 0.0
        %708 = vmatpush1.msra.mxu0 %v684
        %709 = vmatprep.subr.mxu0 0.0
        %710 = vmatpush1.msra.mxu0 %v683
        %711 = vmatprep.subr.mxu0 0.0
        %712 = vmatpush1.msra.mxu0 %v682
        %713 = vmatprep.subr.mxu0 0.0
        %714 = vmatpush1.msra.mxu0 %v681
        %715 = vmatprep.subr.mxu0 0.0
        %716 = vmatpush1.msra.mxu0 %v680
        %717 = vmatprep.subr.mxu0 0.0
        %718 = vmatpush1.msra.mxu0 %v679
        %719 = vmatprep.subr.mxu0 0.0
        %720 = vmatpush1.msra.mxu0 %v678
        %721 = vmatprep.subr.mxu0 0.0
        %722 = vmatpush1.msra.mxu0 %v677
        %723 = vmatprep.subr.mxu0 0.0
        %724 = vmatpush2.msra.mxu0 0.0
        %725 = vmatprep.subr.mxu0 0.0
        %726 = vmatpush2.msra.mxu0 0.0
        %727 = vmatprep.subr.mxu0 0.0
        %728 = vmatpush2.msra.mxu0 0.0
        %729 = vmatprep.subr.mxu0 0.0
        %730 = vmatpush2.msra.mxu0 0.0
        %731 = vmatprep.subr.mxu0 0.0
        %732 = vmatpush2.msra.mxu0 0.0
        %733 = vmatprep.subr.mxu0 0.0
        %734 = vmatpush2.msra.mxu0 0.0
        %735 = vmatprep.subr.mxu0 0.0
        %736 = vmatpush2.msra.mxu0 0.0
        %737 = vmatprep.subr.mxu0 0.0
        %738 = vmatpush2.msra.mxu0 0.0
        %739 = vmatprep.subr.mxu0 0.0
        %740 = vmatpush2.msra.mxu0 0.0
        %741 = vmatprep.subr.mxu0 0.0
        %742 = vmatpush2.msra.mxu0 0.0
        %743 = vmatprep.subr.mxu0 0.0
        %744 = vmatpush2.msra.mxu0 0.0
        %745 = vmatprep.subr.mxu0 0.0
        %746 = vmatpush2.msra.mxu0 0.0
        %747 = vmatprep.subr.mxu0 0.0
        %748 = vmatpush2.msra.mxu0 0.0
        %749 = vmatprep.subr.mxu0 0.0
        %750 = vmatpush2.msra.mxu0 0.0
        %751 = vmatprep.subr.mxu0 0.0
        %752 = vmatpush2.msra.mxu0 0.0
        %753 = vmatprep.subr.mxu0 0.0
        %754 = vmatpush2.msra.mxu0 0.0
        %755 = vmatprep.mubr.f32.mxu0 0.0
        %756 = vmatmul.mubr.f32.gmra.mxu0 %v686
        %v757 = vpop.f32.mrf.mxu0
        %v758 = vadd.f32 0.0, %v757
        %v759 = vpop.f32.mrf.mxu0
        %760 = vmatprep.mubr.f32.mxu0 0.0
        %761 = vmatmul.mubr.f32.gmra.mxu0 %v689
        %v762 = vpop.f32.mrf.mxu0
        %v763 = vadd.f32 0.0, %v762
        %v764 = vpop.f32.mrf.mxu0
        %765 = vdwg.mxu0
        %v766 = vrcp.pop %v758
        %v767 = vrcp.pop %v763
        %v768 = vld [vmem:[%s7] sm:$0xf]
        %vm769 = vcmask 31744
        %v771 = vsel %vm769, %v766, 0
        %v774 = vsel %vm769, %v767, 0
        %vm776 = vcmask 1043456
        %v778 = vsel %vm776, %v768, 0
        %780 = vmatprep.subr.mxu0 0.0
        %781 = vmatpush1.msra.mxu0 0.0
        %782 = vmatprep.subr.mxu0 0.0
        %783 = vmatpush1.msra.mxu0 0.0
        %784 = vmatprep.subr.mxu0 0.0
        %785 = vmatpush1.msra.mxu0 0.0
        %786 = vmatprep.subr.mxu0 0.0
        %787 = vmatpush1.msra.mxu0 0.0
        %788 = vmatprep.subr.mxu0 0.0
        %789 = vmatpush1.msra.mxu0 0.0
        %790 = vmatprep.subr.mxu0 0.0
        %791 = vmatpush1.msra.mxu0 0.0
        %792 = vmatprep.subr.mxu0 0.0
        %793 = vmatpush1.msra.mxu0 0.0
        %794 = vmatprep.subr.mxu0 0.0
        %795 = vmatpush1.msra.mxu0 0.0
        %796 = vmatprep.subr.mxu0 0.0
        %797 = vmatpush1.msra.mxu0 0.0
        %798 = vmatprep.subr.mxu0 0.0
        %799 = vmatpush1.msra.mxu0 0.0
        %800 = vmatprep.subr.mxu0 0.0
        %801 = vmatpush1.msra.mxu0 0.0
        %802 = vmatprep.subr.mxu0 0.0
        %803 = vmatpush1.msra.mxu0 0.0
        %804 = vmatprep.subr.mxu0 0.0
        %805 = vmatpush1.msra.mxu0 0.0
        %806 = vmatprep.subr.mxu0 0.0
        %807 = vmatpush1.msra.mxu0 0.0
        %808 = vmatprep.subr.mxu0 0.0
        %809 = vmatpush1.msra.mxu0 0.0
        %810 = vmatprep.subr.mxu0 0.0
        %811 = vmatpush1.msra.mxu0 %v778
        %812 = vmatprep.subr.mxu0 0.0
        %813 = vmatpush2.msra.mxu0 0.0
        %814 = vmatprep.subr.mxu0 0.0
        %815 = vmatpush2.msra.mxu0 0.0
        %816 = vmatprep.subr.mxu0 0.0
        %817 = vmatpush2.msra.mxu0 0.0
        %818 = vmatprep.subr.mxu0 0.0
        %819 = vmatpush2.msra.mxu0 0.0
        %820 = vmatprep.subr.mxu0 0.0
        %821 = vmatpush2.msra.mxu0 0.0
        %822 = vmatprep.subr.mxu0 0.0
        %823 = vmatpush2.msra.mxu0 0.0
        %824 = vmatprep.subr.mxu0 0.0
        %825 = vmatpush2.msra.mxu0 0.0
        %826 = vmatprep.subr.mxu0 0.0
        %827 = vmatpush2.msra.mxu0 0.0
        %828 = vmatprep.subr.mxu0 0.0
        %829 = vmatpush2.msra.mxu0 0.0
        %830 = vmatprep.subr.mxu0 0.0
        %831 = vmatpush2.msra.mxu0 0.0
        %832 = vmatprep.subr.mxu0 0.0
        %833 = vmatpush2.msra.mxu0 0.0
        %834 = vmatprep.subr.mxu0 0.0
        %835 = vmatpush2.msra.mxu0 0.0
        %836 = vmatprep.subr.mxu0 0.0
        %837 = vmatpush2.msra.mxu0 0.0
        %838 = vmatprep.subr.mxu0 0.0
        %839 = vmatpush2.msra.mxu0 0.0
        %840 = vmatprep.subr.mxu0 0.0
        %841 = vmatpush2.msra.mxu0 0.0
        %842 = vmatprep.subr.mxu0 0.0
        %843 = vmatpush2.msra.mxu0 0.0
        %844 = vmatprep.mubr.f32.mxu0 0.0
        %845 = vmatmul.mubr.f32.gmra.mxu0 %v771
        %v846 = vpop.f32.mrf.mxu0
        %v847 = vadd.f32 0.0, %v846
        %v848 = vpop.f32.mrf.mxu0
        %849 = vmatprep.mubr.f32.mxu0 0.0
        %850 = vmatmul.mubr.f32.gmra.mxu0 %v774
        %v851 = vpop.f32.mrf.mxu0
        %v852 = vadd.f32 0.0, %v851
        %v853 = vpop.f32.mrf.mxu0
        %854 = vdwg.mxu0
        %v855 = vmul.f32 %v674, %v847
        %v856 = vmul.f32 %v676, %v852
        %v857 = vld [vmem:[%s5] sm:$0xff]
        %v858 = vld [vmem:[%s5 + $0x8] sm:$0xff]
        %v859 = vadd.f32 %v855, %v857
        %v860 = vadd.f32 %v856, %v858
        %v862 = vsel %vm664, %v859, 0
        %v865 = vsel %vm664, %v860, 0
        %867 = vmatprep.subr.mxu0 0.0
        %868 = vmatpush1.msra.mxu0 0.0
        %869 = vmatprep.subr.mxu0 0.0
        %870 = vmatpush1.msra.mxu0 0.0
        %871 = vmatprep.subr.mxu0 0.0
        %872 = vmatpush1.msra.mxu0 0.0
        %873 = vmatprep.subr.mxu0 0.0
        %874 = vmatpush1.msra.mxu0 0.0
        %875 = vmatprep.subr.mxu0 0.0
        %876 = vmatpush1.msra.mxu0 0.0
        %877 = vmatprep.subr.mxu0 0.0
        %878 = vmatpush1.msra.mxu0 0.0
        %879 = vmatprep.subr.mxu0 0.0
        %880 = vmatpush1.msra.mxu0 0.0
        %881 = vmatprep.subr.mxu0 0.0
        %882 = vmatpush1.msra.mxu0 0.0
        %883 = vmatprep.subr.mxu0 0.0
        %884 = vmatpush1.msra.mxu0 %v530
        %885 = vmatprep.subr.mxu0 0.0
        %886 = vmatpush1.msra.mxu0 %v529
        %887 = vmatprep.subr.mxu0 0.0
        %888 = vmatpush1.msra.mxu0 %v528
        %889 = vmatprep.subr.mxu0 0.0
        %890 = vmatpush1.msra.mxu0 %v527
        %891 = vmatprep.subr.mxu0 0.0
        %892 = vmatpush1.msra.mxu0 %v526
        %893 = vmatprep.subr.mxu0 0.0
        %894 = vmatpush1.msra.mxu0 %v525
        %895 = vmatprep.subr.mxu0 0.0
        %896 = vmatpush1.msra.mxu0 %v524
        %897 = vmatprep.subr.mxu0 0.0
        %898 = vmatpush1.msra.mxu0 %v523
        %899 = vmatprep.subr.mxu0 0.0
        %900 = vmatpush2.msra.mxu0 0.0
        %901 = vmatprep.subr.mxu0 0.0
        %902 = vmatpush2.msra.mxu0 0.0
        %903 = vmatprep.subr.mxu0 0.0
        %904 = vmatpush2.msra.mxu0 0.0
        %905 = vmatprep.subr.mxu0 0.0
        %906 = vmatpush2.msra.mxu0 0.0
        %907 = vmatprep.subr.mxu0 0.0
        %908 = vmatpush2.msra.mxu0 0.0
        %909 = vmatprep.subr.mxu0 0.0
        %910 = vmatpush2.msra.mxu0 0.0
        %911 = vmatprep.subr.mxu0 0.0
        %912 = vmatpush2.msra.mxu0 0.0
        %913 = vmatprep.subr.mxu0 0.0
        %914 = vmatpush2.msra.mxu0 0.0
        %915 = vmatprep.subr.mxu0 0.0
        %916 = vmatpush2.msra.mxu0 0.0
        %917 = vmatprep.subr.mxu0 0.0
        %918 = vmatpush2.msra.mxu0 0.0
        %919 = vmatprep.subr.mxu0 0.0
        %920 = vmatpush2.msra.mxu0 0.0
        %921 = vmatprep.subr.mxu0 0.0
        %922 = vmatpush2.msra.mxu0 0.0
        %923 = vmatprep.subr.mxu0 0.0
        %924 = vmatpush2.msra.mxu0 0.0
        %925 = vmatprep.subr.mxu0 0.0
        %926 = vmatpush2.msra.mxu0 0.0
        %927 = vmatprep.subr.mxu0 0.0
        %928 = vmatpush2.msra.mxu0 0.0
        %929 = vmatprep.subr.mxu0 0.0
        %930 = vmatpush2.msra.mxu0 0.0
        %931 = vmatprep.mubr.f32.mxu0 0.0
        %932 = vmatmul.mubr.f32.gmra.mxu0 %v862
        %v933 = vpop.f32.mrf.mxu0
        %v934 = vadd.f32 0.0, %v933
        %v935 = vpop.f32.mrf.mxu0
        %936 = vmatprep.mubr.f32.mxu0 0.0
        %937 = vmatmul.mubr.f32.gmra.mxu0 %v865
        %v938 = vpop.f32.mrf.mxu0
        %v939 = vadd.f32 0.0, %v938
        %v940 = vpop.f32.mrf.mxu0
        %941 = vdwg.mxu0
        %v942 = vld [vmem:[%s8] sm:$0xff]
        %v943 = vld [vmem:[%s8 + $0x8] sm:$0xff]
        %v944 = vld [vmem:[%s8 + $0x10] sm:$0xff]
        %v945 = vld [vmem:[%s8 + $0x18] sm:$0xff]
        %v946 = vld [vmem:[%s9] sm:$0x1]
        %v948 = vlaneseq
        %v949 = vshrl.u32 %v948, 7
        %v950 = vsub.s32 0, %v949
        %v951 = vrot.slane %v946, %v950
        %v954 = vsel %vm568, %v934, 0
        %v957 = vsel %vm568, %v939, 0
        %959 = vmatprep.subr.mxu0 0.0
        %960 = vmatpush1.msra.mxu0 0.0
        %961 = vmatprep.subr.mxu0 0.0
        %962 = vmatpush1.msra.mxu0 0.0
        %963 = vmatprep.subr.mxu0 0.0
        %964 = vmatpush1.msra.mxu0 0.0
        %965 = vmatprep.subr.mxu0 0.0
        %966 = vmatpush1.msra.mxu0 0.0
        %967 = vmatprep.subr.mxu0 0.0
        %968 = vmatpush1.msra.mxu0 0.0
        %969 = vmatprep.subr.mxu0 0.0
        %970 = vmatpush1.msra.mxu0 0.0
        %971 = vmatprep.subr.mxu0 0.0
        %972 = vmatpush1.msra.mxu0 0.0
        %973 = vmatprep.subr.mxu0 0.0
        %974 = vmatpush1.msra.mxu0 0.0
        %975 = vmatprep.subr.mxu0 0.0
        %976 = vmatpush1.msra.mxu0 0.0
        %977 = vmatprep.subr.mxu0 0.0
        %978 = vmatpush1.msra.mxu0 0.0
        %979 = vmatprep.subr.mxu0 0.0
        %980 = vmatpush1.msra.mxu0 0.0
        %981 = vmatprep.subr.mxu0 0.0
        %982 = vmatpush1.msra.mxu0 0.0
        %983 = vmatprep.subr.mxu0 0.0
        %984 = vmatpush1.msra.mxu0 %v945
        %985 = vmatprep.subr.mxu0 0.0
        %986 = vmatpush1.msra.mxu0 %v944
        %987 = vmatprep.subr.mxu0 0.0
        %988 = vmatpush1.msra.mxu0 %v943
        %989 = vmatprep.subr.mxu0 0.0
        %990 = vmatpush1.msra.mxu0 %v942
        %991 = vmatprep.subr.mxu0 0.0
        %992 = vmatpush2.msra.mxu0 0.0
        %993 = vmatprep.subr.mxu0 0.0
        %994 = vmatpush2.msra.mxu0 0.0
        %995 = vmatprep.subr.mxu0 0.0
        %996 = vmatpush2.msra.mxu0 0.0
        %997 = vmatprep.subr.mxu0 0.0
        %998 = vmatpush2.msra.mxu0 0.0
        %999 = vmatprep.subr.mxu0 0.0
        %1000 = vmatpush2.msra.mxu0 0.0
        %1001 = vmatprep.subr.mxu0 0.0
        %1002 = vmatpush2.msra.mxu0 0.0
        %1003 = vmatprep.subr.mxu0 0.0
        %1004 = vmatpush2.msra.mxu0 0.0
        %1005 = vmatprep.subr.mxu0 0.0
        %1006 = vmatpush2.msra.mxu0 0.0
        %1007 = vmatprep.subr.mxu0 0.0
        %1008 = vmatpush2.msra.mxu0 0.0
        %1009 = vmatprep.subr.mxu0 0.0
        %1010 = vmatpush2.msra.mxu0 0.0
        %1011 = vmatprep.subr.mxu0 0.0
        %1012 = vmatpush2.msra.mxu0 0.0
        %1013 = vmatprep.subr.mxu0 0.0
        %1014 = vmatpush2.msra.mxu0 0.0
        %1015 = vmatprep.subr.mxu0 0.0
        %1016 = vmatpush2.msra.mxu0 0.0
        %1017 = vmatprep.subr.mxu0 0.0
        %1018 = vmatpush2.msra.mxu0 0.0
        %1019 = vmatprep.subr.mxu0 0.0
        %1020 = vmatpush2.msra.mxu0 0.0
        %1021 = vmatprep.subr.mxu0 0.0
        %1022 = vmatpush2.msra.mxu0 0.0
        %1023 = vmatprep.mubr.f32.mxu0 0.0
        %1024 = vmatmul.mubr.f32.gmra.mxu0 %v954
        %v1025 = vpop.f32.mrf.mxu0
        %v1026 = vadd.f32 %v951, %v1025
        %v1027 = vpop.f32.mrf.mxu0
        %1028 = vmatprep.mubr.f32.mxu0 0.0
        %1029 = vmatmul.mubr.f32.gmra.mxu0 %v957
        %v1030 = vpop.f32.mrf.mxu0
        %v1031 = vadd.f32 %v951, %v1030
        %v1032 = vpop.f32.mrf.mxu0
        %1033 = vdwg.mxu0
        %1034 = vst.msk [vmem:[%s363] sm:$0xff] %vm568, %v1026
        %1035 = vst.msk [vmem:[%s363 + $0x8] sm:$0xff] %vm568, %v1031
        %s1036 = sand.u32 %s252, 1
        %s1037 = scalar_lea.sflag [#allocation3], %s1036
        %s1038 = sand.u32 %s252, 1
        %s1039 = smul.addr %s1038, 16
        %s1040 = scalar_lea.vmem [#allocation2], %s1039
        // Predicated region
        $region61: #{ga_mhatt_forward.1} parent=59 // pred_check
          %p1041 = pneg %p262
        $region62: #{ga_mhatt_forward.1} parent=59 // pred_check_branch
          %1043 = sbr.rel (%p1041) target = $region64
        $region63: #{ga_mhatt_forward.1} parent=59 // pred_region
          %s1045 = ssub.s32 256, 256
          %1046 = vsyncadd %s1037, %s1045
          %s1047 = smul.addr %s24, 2
          %s1048 = smul.addr %s1047, 128
          %s1049 = scalar_lea.hbm %s10, %s1048
          %s1050 = sshll.u32 %s1040, 4
          %s1051 = int_to_ptr.vmem [resolvable:$true] %s1050
          %1056 = dma.vmem_to_hbm [thread:$0]  %s1051, 256, %s1049, %s1037, 128, 128, 8
        $region64: #{ga_mhatt_forward.1} parent=59 // pred_fallthru
          _
      $region60: #{ga_mhatt_forward.1} parent=5 // pred_fallthru
        _
      %p1057 = scmp.le.s32.totalorder 2, %s19
      // Predicated region
      $region65: #{ga_mhatt_forward.1} parent=5 // pred_check
        %p1058 = pneg %p1057
      $region66: #{ga_mhatt_forward.1} parent=5 // pred_check_branch
        %1060 = sbr.rel (%p1058) target = $region68
      $region67: #{ga_mhatt_forward.1} parent=5 // pred_region
        %s1061 = ssub.s32 %s19, 2
        // Predicated region
        $region69: #{ga_mhatt_forward.1} parent=67 // pred_check
          %p1062 = pneg %p268
        $region70: #{ga_mhatt_forward.1} parent=67 // pred_check_branch
          %1064 = sbr.rel (%p1062) target = $region72
        $region71: #{ga_mhatt_forward.1} parent=67 // pred_region
          %s1065 = sand.u32 %s253, 1
          %s1066 = scalar_lea.sflag [#allocation3], %s1065
          %s1067 = sand.u32 %s253, 1
          %s1068 = smul.addr %s1067, 16
          %s1069 = scalar_lea.vmem [#allocation2], %s1068
          %1070 = dma.done %s1066, 256
        $region72: #{ga_mhatt_forward.1} parent=67 // pred_fallthru
          _
      $region68: #{ga_mhatt_forward.1} parent=5 // pred_fallthru
        _
    $region6: #{ga_mhatt_forward.1} parent=1 // loop_footer
      %s23 = sadd.s32 1, %s19
    $region7: #{ga_mhatt_forward.1} parent=1 // loop_footer_branch
      %18 = sbr.rel target = $region3
    $region8: #{ga_mhatt_forward.1} parent=1 // loop_exit
      _
    %1071 = vsyncpa [#allocation3], 1
    %s1072 = scalar_lea.sflag [#allocation3], 1
    %1073 = vsyncpa %s1072, 1

</llo_original>
